<compile_context>
chip_gen: v7x
topology: tpu7x:2x2x1
jax: 0.10.0
libtpu: 0.0.40
codegen_flags: <defaults>
</compile_context>

<pallas_src>
import jax
import jax.numpy as jnp
from jax.experimental import pallas as pl
from jax.experimental.pallas import tpu as pltpu

# ---- small, forward-consistent shapes -------------------------------------
B, NSUB, NNODES, NFEAT = 2, 4, 8, 16          # batch, sub-graphs, nodes/graph, nfeat
NHID = (32, 32, 32, 64)                       # nhid[0..3]
NHID4 = 64                                    # hard-coded in the module
EPS = 1e-5                                    # BatchNorm1d eps


# ---------------------------------------------------------------------------
# Fused forward kernel.
#   x_ref     : [B*NSUB*NNODES, NFEAT]
#   comb*_ref : gc2 + (BN0-folded) fc0 pre-fused affine  [NHID0, NHID2]
#   fc1w_ref  : [NSUB, NHID2, NHID3]   (BN1-folded, pre-reshaped per sub-graph)
#   output    : [B, 1]
# ---------------------------------------------------------------------------
def _gcn_kernel(x_ref, gc1w_ref, gc1b_ref, combw_ref, combb_ref,
                fc1w_ref, fc1b_ref, fc2w_ref, fc2b_ref, fcw_ref, fcb_ref,
                o_ref):
    f32 = jnp.float32

    # ---- gc1 + ReLU --------------------------------------------------------
    h = jnp.dot(x_ref[...], gc1w_ref[...], preferred_element_type=f32) + gc1b_ref[...]
    h = jnp.maximum(h, 0.0)
    # TODO(synk): F.dropout(f, p, training=self.training) -> identity in eval mode.

    # ---- node sum (moved before gc2: sum commutes with the affine gc2) -----
    # [B*NSUB*NNODES, NHID0] -> [B*NSUB, NNODES, NHID0] -> unrolled VPU adds.
    h3 = h.reshape(B * NSUB, NNODES, NHID[0])
    s = h3[:, 0, :]
    for n in range(1, NNODES):
        s = s + h3[:, n, :]                                   # [B*NSUB, NHID0]

    # ---- fused (gc2 -> node-sum-bias -> bn0-folded fc0) + ReLU --------------
    g = jnp.maximum(
        jnp.dot(s, combw_ref[...], preferred_element_type=f32) + combb_ref[...], 0.0)

    # ---- fc1 (+ folded bn1) + ReLU ------------------------------------------
    # Equivalent to g.reshape(B, NSUB*NHID2) @ W1 but as per-sub-graph matmuls
    # so no lane-layout (32 -> 128) reshape is needed in-kernel.
    g3 = g.reshape(B, NSUB, NHID[2])
    acc = jnp.zeros((B, NHID[3]), f32)
    for si in range(NSUB):
        acc = acc + jnp.dot(g3[:, si, :], fc1w_ref[si], preferred_element_type=f32)
    h1 = jnp.maximum(acc + fc1b_ref[...], 0.0)                # [B, NHID3]

    # ---- fc2 (+ folded bn2) + ReLU ------------------------------------------
    h2 = jnp.maximum(
        jnp.dot(h1, fc2w_ref[...], preferred_element_type=f32) + fc2b_ref[...], 0.0)

    # ---- final fc ------------------------------------------------------------
    o_ref[...] = jnp.dot(h2, fcw_ref[...], preferred_element_type=f32) + fcb_ref[...]


_NUM_INPUTS = 11
_gcn_call = pl.pallas_call(
    _gcn_kernel,
    out_shape=jax.ShapeDtypeStruct((B, 1), jnp.float32),
    in_specs=[pl.BlockSpec(memory_space=pltpu.MemorySpace.VMEM)] * _NUM_INPUTS,
    out_specs=pl.BlockSpec(memory_space=pltpu.MemorySpace.VMEM),
)


# ---------------------------------------------------------------------------
# Parameter init (deterministic, PyTorch-like uniform fan-in init).
# ---------------------------------------------------------------------------
def init_params(key):
    ks = iter(jax.random.split(key, 9))           # 9 consumers below

    def lin(k, fan_in, fan_out):
        kw, kb = jax.random.split(k)
        bound = 1.0 / jnp.sqrt(jnp.float32(fan_in))
        w = jax.random.uniform(kw, (fan_in, fan_out), jnp.float32, -bound, bound)
        b = jax.random.uniform(kb, (1, fan_out), jnp.float32, -bound, bound)
        return w, b

    def bn(k, dim):
        kg, kb, km, kv = jax.random.split(k, 4)
        gamma = 1.0 + 0.1 * jax.random.normal(kg, (1, dim), jnp.float32)
        beta = 0.1 * jax.random.normal(kb, (1, dim), jnp.float32)
        rmean = 0.1 * jax.random.normal(km, (1, dim), jnp.float32)
        rvar = 1.0 + 0.1 * jnp.abs(jax.random.normal(kv, (1, dim), jnp.float32))
        return gamma, beta, rmean, rvar

    p = {}
    p["gc1_w"], p["gc1_b"] = lin(next(ks), NFEAT, NHID[0])
    p["gc2_w"], p["gc2_b"] = lin(next(ks), NHID[0], NHID[1])
    p["fc0_w"], p["fc0_b"] = lin(next(ks), NHID[1], NHID[2])
    p["bn0"] = bn(next(ks), NHID[2])
    p["fc1_w"], p["fc1_b"] = lin(next(ks), NSUB * NHID[2], NHID[3])
    p["bn1"] = bn(next(ks), NHID[3])
    p["fc2_w"], p["fc2_b"] = lin(next(ks), NHID[3], NHID4)
    p["bn2"] = bn(next(ks), NHID4)
    p["fc_w"], p["fc_b"] = lin(next(ks), NHID4, 1)
    return p


# ---------------------------------------------------------------------------
# One-time weight prep:
#   * fold eval-mode BatchNorm into the preceding Linear,
#   * fuse gc2 with the (folded) fc0 into one affine (node-sum commutes
#     with gc2; its bias picks up a factor of NNODES),
#   * pre-reshape fc1 weights to per-sub-graph blocks.
# ---------------------------------------------------------------------------
def fold_params(p):
    hp = jax.lax.Precision.HIGHEST

    def fold(w, b, bnp):
        gamma, beta, rmean, rvar = bnp
        scale = gamma / jnp.sqrt(rvar + EPS)      # [1, out]
        shift = beta - rmean * scale
        return w * scale, b * scale + shift

    fp = {"gc1_w": p["gc1_w"], "gc1_b": p["gc1_b"],
          "fc_w": p["fc_w"], "fc_b": p["fc_b"]}

    w0f, b0f = fold(p["fc0_w"], p["fc0_b"], p["bn0"])
    # sum_n(h_n @ W2 + b2) = (sum_n h_n) @ W2 + NNODES*b2 ; then fold into fc0:
    fp["comb_w"] = jnp.dot(p["gc2_w"], w0f, precision=hp)                 # [NHID0, NHID2]
    fp["comb_b"] = NNODES * jnp.dot(p["gc2_b"], w0f, precision=hp) + b0f  # [1, NHID2]

    w1, b1 = fold(p["fc1_w"], p["fc1_b"], p["bn1"])
    fp["fc1_w"] = w1.reshape(NSUB, NHID[2], NHID[3])   # [nsub, nhid2, nhid3]
    fp["fc1_b"] = b1
    fp["fc2_w"], fp["fc2_b"] = fold(p["fc2_w"], p["fc2_b"], p["bn2"])
    return fp


# ---------------------------------------------------------------------------
# Wrapper: mirrors GCN.forward(x, adj).  adj accepted but unused (as in the
# reference forward).  Single fused pallas_call.
# ---------------------------------------------------------------------------
def gcn_forward(x, adj, folded):
    del adj  # not used by GCN.forward
    xf = x.reshape(B * NSUB * NNODES, NFEAT).astype(jnp.float32)
    return _gcn_call(xf,
                     folded["gc1_w"], folded["gc1_b"],
                     folded["comb_w"], folded["comb_b"],
                     folded["fc1_w"], folded["fc1_b"],
                     folded["fc2_w"], folded["fc2_b"],
                     folded["fc_w"], folded["fc_b"])           # [B, 1]


# ---------------------------------------------------------------------------
# Pure-JAX reference (mirrors the PyTorch forward, eval mode).
# ---------------------------------------------------------------------------
def reference(x, p):
    hp = jax.lax.Precision.HIGHEST

    def bn_eval(h, bnp):
        gamma, beta, rmean, rvar = bnp
        return (h - rmean) / jnp.sqrt(rvar + EPS) * gamma + beta

    f = jnp.dot(x.reshape(-1, NFEAT), p["gc1_w"], precision=hp) + p["gc1_b"]
    f = jnp.maximum(f, 0.0)
    f = jnp.dot(f, p["gc2_w"], precision=hp) + p["gc2_b"]
    f = f.reshape(B, NSUB, NNODES, NHID[1]).sum(axis=2).reshape(-1, NHID[1])
    f = jnp.maximum(bn_eval(jnp.dot(f, p["fc0_w"], precision=hp) + p["fc0_b"],
                            p["bn0"]), 0.0)
    f = f.reshape(-1, NSUB * NHID[2])
    f = jnp.maximum(bn_eval(jnp.dot(f, p["fc1_w"], precision=hp) + p["fc1_b"],
                            p["bn1"]), 0.0)
    f = jnp.maximum(bn_eval(jnp.dot(f, p["fc2_w"], precision=hp) + p["fc2_b"],
                            p["bn2"]), 0.0)
    return jnp.dot(f, p["fc_w"], precision=hp) + p["fc_b"]


if __name__ == "__main__":
    key = jax.random.PRNGKey(0)
    kx, ka, kp = jax.random.split(key, 3)
    x = jax.random.normal(kx, (B, NSUB, NNODES, NFEAT), jnp.float32)
    adj = jax.random.normal(ka, (B, NSUB, NNODES, NNODES), jnp.float32)  # unused in forward
    params = init_params(kp)
    folded = fold_params(params)                 # one-time BN fold / gc2+fc0 fuse

    out = gcn_forward(x, adj, folded)
    out = jax.block_until_ready(out)

    ref = reference(x, params)
    assert out.shape == (B, 1), out.shape
    assert jnp.allclose(out, ref, atol=1e-3, rtol=1e-3), (out, ref)
    print("KERNEL_OK")
</pallas_src>

<mosaic_0001>
module attributes {stable_mosaic.version = 11 : i64} {
  func.func @_gcn_kernel(%arg0: memref<64x16xf32, #tpu.memory_space<vmem>>, %arg1: memref<16x32xf32, #tpu.memory_space<vmem>>, %arg2: memref<1x32xf32, #tpu.memory_space<vmem>>, %arg3: memref<32x32xf32, #tpu.memory_space<vmem>>, %arg4: memref<1x32xf32, #tpu.memory_space<vmem>>, %arg5: memref<4x32x64xf32, #tpu.memory_space<vmem>>, %arg6: memref<1x64xf32, #tpu.memory_space<vmem>>, %arg7: memref<64x64xf32, #tpu.memory_space<vmem>>, %arg8: memref<1x64xf32, #tpu.memory_space<vmem>>, %arg9: memref<64x1xf32, #tpu.memory_space<vmem>>, %arg10: memref<1x1xf32, #tpu.memory_space<vmem>>, %arg11: memref<2x1xf32, #tpu.memory_space<vmem>>) attributes {dimension_semantics = [], scalar_prefetch = 0 : i64, scratch_operands = 0 : i64, tpu.core_type = #tpu.core_type<tc>} {
    %c0 = arith.constant 0 : index
    %c0_0 = arith.constant 0 : index
    %0 = vector.load %arg0[%c0, %c0_0] : memref<64x16xf32, #tpu.memory_space<vmem>>, vector<64x16xf32>
    %c0_1 = arith.constant 0 : index
    %c0_2 = arith.constant 0 : index
    %1 = vector.load %arg1[%c0_1, %c0_2] : memref<16x32xf32, #tpu.memory_space<vmem>>, vector<16x32xf32>
    %cst = arith.constant dense<0.000000e+00> : vector<64x32xf32>
    %2 = tpu.matmul %0, %1, %cst {dimension_numbers = #tpu.dot_dimension_numbers<[1], [0], [0], [1], [0, 0, 1, 1], [], []>} : vector<64x16xf32>, vector<16x32xf32>, vector<64x32xf32> -> vector<64x32xf32>
    %c0_3 = arith.constant 0 : index
    %c0_4 = arith.constant 0 : index
    %3 = vector.load %arg2[%c0_3, %c0_4] : memref<1x32xf32, #tpu.memory_space<vmem>>, vector<1x32xf32>
    %4 = vector.broadcast %3 : vector<1x32xf32> to vector<64x32xf32>
    %5 = arith.addf %2, %4 : vector<64x32xf32>
    %cst_5 = arith.constant 0.000000e+00 : f32
    %6 = vector.broadcast %cst_5 : f32 to vector<64x32xf32>
    %7 = arith.maximumf %5, %6 : vector<64x32xf32>
    %8 = vector.shape_cast %7 : vector<64x32xf32> to vector<8x8x32xf32>
    %9 = vector.extract_strided_slice %8 {offsets = [0, 0, 0], sizes = [8, 1, 32], strides = [1, 1, 1]} : vector<8x8x32xf32> to vector<8x1x32xf32>
    %10 = vector.shape_cast %9 : vector<8x1x32xf32> to vector<8x32xf32>
    %11 = vector.extract_strided_slice %8 {offsets = [0, 1, 0], sizes = [8, 1, 32], strides = [1, 1, 1]} : vector<8x8x32xf32> to vector<8x1x32xf32>
    %12 = vector.shape_cast %11 : vector<8x1x32xf32> to vector<8x32xf32>
    %13 = arith.addf %10, %12 : vector<8x32xf32>
    %14 = vector.extract_strided_slice %8 {offsets = [0, 2, 0], sizes = [8, 1, 32], strides = [1, 1, 1]} : vector<8x8x32xf32> to vector<8x1x32xf32>
    %15 = vector.shape_cast %14 : vector<8x1x32xf32> to vector<8x32xf32>
    %16 = arith.addf %13, %15 : vector<8x32xf32>
    %17 = vector.extract_strided_slice %8 {offsets = [0, 3, 0], sizes = [8, 1, 32], strides = [1, 1, 1]} : vector<8x8x32xf32> to vector<8x1x32xf32>
    %18 = vector.shape_cast %17 : vector<8x1x32xf32> to vector<8x32xf32>
    %19 = arith.addf %16, %18 : vector<8x32xf32>
    %20 = vector.extract_strided_slice %8 {offsets = [0, 4, 0], sizes = [8, 1, 32], strides = [1, 1, 1]} : vector<8x8x32xf32> to vector<8x1x32xf32>
    %21 = vector.shape_cast %20 : vector<8x1x32xf32> to vector<8x32xf32>
    %22 = arith.addf %19, %21 : vector<8x32xf32>
    %23 = vector.extract_strided_slice %8 {offsets = [0, 5, 0], sizes = [8, 1, 32], strides = [1, 1, 1]} : vector<8x8x32xf32> to vector<8x1x32xf32>
    %24 = vector.shape_cast %23 : vector<8x1x32xf32> to vector<8x32xf32>
    %25 = arith.addf %22, %24 : vector<8x32xf32>
    %26 = vector.extract_strided_slice %8 {offsets = [0, 6, 0], sizes = [8, 1, 32], strides = [1, 1, 1]} : vector<8x8x32xf32> to vector<8x1x32xf32>
    %27 = vector.shape_cast %26 : vector<8x1x32xf32> to vector<8x32xf32>
    %28 = arith.addf %25, %27 : vector<8x32xf32>
    %29 = vector.extract_strided_slice %8 {offsets = [0, 7, 0], sizes = [8, 1, 32], strides = [1, 1, 1]} : vector<8x8x32xf32> to vector<8x1x32xf32>
    %30 = vector.shape_cast %29 : vector<8x1x32xf32> to vector<8x32xf32>
    %31 = arith.addf %28, %30 : vector<8x32xf32>
    %c0_6 = arith.constant 0 : index
    %c0_7 = arith.constant 0 : index
    %32 = vector.load %arg3[%c0_6, %c0_7] : memref<32x32xf32, #tpu.memory_space<vmem>>, vector<32x32xf32>
    %cst_8 = arith.constant dense<0.000000e+00> : vector<8x32xf32>
    %33 = tpu.matmul %31, %32, %cst_8 {dimension_numbers = #tpu.dot_dimension_numbers<[1], [0], [0], [1], [0, 0, 1, 1], [], []>} : vector<8x32xf32>, vector<32x32xf32>, vector<8x32xf32> -> vector<8x32xf32>
    %c0_9 = arith.constant 0 : index
    %c0_10 = arith.constant 0 : index
    %34 = vector.load %arg4[%c0_9, %c0_10] : memref<1x32xf32, #tpu.memory_space<vmem>>, vector<1x32xf32>
    %35 = vector.broadcast %34 : vector<1x32xf32> to vector<8x32xf32>
    %36 = arith.addf %33, %35 : vector<8x32xf32>
    %cst_11 = arith.constant 0.000000e+00 : f32
    %37 = vector.broadcast %cst_11 : f32 to vector<8x32xf32>
    %38 = arith.maximumf %36, %37 : vector<8x32xf32>
    %39 = vector.shape_cast %38 : vector<8x32xf32> to vector<2x4x32xf32>
    %cst_12 = arith.constant 0.000000e+00 : f32
    %40 = vector.broadcast %cst_12 : f32 to vector<2x64xf32>
    %41 = vector.extract_strided_slice %39 {offsets = [0, 0, 0], sizes = [2, 1, 32], strides = [1, 1, 1]} : vector<2x4x32xf32> to vector<2x1x32xf32>
    %42 = vector.shape_cast %41 : vector<2x1x32xf32> to vector<2x32xf32>
    %c0_13 = arith.constant 0 : index
    %c0_14 = arith.constant 0 : index
    %c0_15 = arith.constant 0 : index
    %43 = vector.load %arg5[%c0_13, %c0_14, %c0_15] : memref<4x32x64xf32, #tpu.memory_space<vmem>>, vector<1x32x64xf32>
    %44 = vector.shape_cast %43 : vector<1x32x64xf32> to vector<32x64xf32>
    %cst_16 = arith.constant dense<0.000000e+00> : vector<2x64xf32>
    %45 = tpu.matmul %42, %44, %cst_16 {dimension_numbers = #tpu.dot_dimension_numbers<[1], [0], [0], [1], [0, 0, 1, 1], [], []>} : vector<2x32xf32>, vector<32x64xf32>, vector<2x64xf32> -> vector<2x64xf32>
    %46 = arith.addf %40, %45 : vector<2x64xf32>
    %47 = vector.extract_strided_slice %39 {offsets = [0, 1, 0], sizes = [2, 1, 32], strides = [1, 1, 1]} : vector<2x4x32xf32> to vector<2x1x32xf32>
    %48 = vector.shape_cast %47 : vector<2x1x32xf32> to vector<2x32xf32>
    %c1 = arith.constant 1 : index
    %c0_17 = arith.constant 0 : index
    %c0_18 = arith.constant 0 : index
    %49 = vector.load %arg5[%c1, %c0_17, %c0_18] : memref<4x32x64xf32, #tpu.memory_space<vmem>>, vector<1x32x64xf32>
    %50 = vector.shape_cast %49 : vector<1x32x64xf32> to vector<32x64xf32>
    %cst_19 = arith.constant dense<0.000000e+00> : vector<2x64xf32>
    %51 = tpu.matmul %48, %50, %cst_19 {dimension_numbers = #tpu.dot_dimension_numbers<[1], [0], [0], [1], [0, 0, 1, 1], [], []>} : vector<2x32xf32>, vector<32x64xf32>, vector<2x64xf32> -> vector<2x64xf32>
    %52 = arith.addf %46, %51 : vector<2x64xf32>
    %53 = vector.extract_strided_slice %39 {offsets = [0, 2, 0], sizes = [2, 1, 32], strides = [1, 1, 1]} : vector<2x4x32xf32> to vector<2x1x32xf32>
    %54 = vector.shape_cast %53 : vector<2x1x32xf32> to vector<2x32xf32>
    %c2 = arith.constant 2 : index
    %c0_20 = arith.constant 0 : index
    %c0_21 = arith.constant 0 : index
    %55 = vector.load %arg5[%c2, %c0_20, %c0_21] : memref<4x32x64xf32, #tpu.memory_space<vmem>>, vector<1x32x64xf32>
    %56 = vector.shape_cast %55 : vector<1x32x64xf32> to vector<32x64xf32>
    %cst_22 = arith.constant dense<0.000000e+00> : vector<2x64xf32>
    %57 = tpu.matmul %54, %56, %cst_22 {dimension_numbers = #tpu.dot_dimension_numbers<[1], [0], [0], [1], [0, 0, 1, 1], [], []>} : vector<2x32xf32>, vector<32x64xf32>, vector<2x64xf32> -> vector<2x64xf32>
    %58 = arith.addf %52, %57 : vector<2x64xf32>
    %59 = vector.extract_strided_slice %39 {offsets = [0, 3, 0], sizes = [2, 1, 32], strides = [1, 1, 1]} : vector<2x4x32xf32> to vector<2x1x32xf32>
    %60 = vector.shape_cast %59 : vector<2x1x32xf32> to vector<2x32xf32>
    %c3 = arith.constant 3 : index
    %c0_23 = arith.constant 0 : index
    %c0_24 = arith.constant 0 : index
    %61 = vector.load %arg5[%c3, %c0_23, %c0_24] : memref<4x32x64xf32, #tpu.memory_space<vmem>>, vector<1x32x64xf32>
    %62 = vector.shape_cast %61 : vector<1x32x64xf32> to vector<32x64xf32>
    %cst_25 = arith.constant dense<0.000000e+00> : vector<2x64xf32>
    %63 = tpu.matmul %60, %62, %cst_25 {dimension_numbers = #tpu.dot_dimension_numbers<[1], [0], [0], [1], [0, 0, 1, 1], [], []>} : vector<2x32xf32>, vector<32x64xf32>, vector<2x64xf32> -> vector<2x64xf32>
    %64 = arith.addf %58, %63 : vector<2x64xf32>
    %c0_26 = arith.constant 0 : index
    %c0_27 = arith.constant 0 : index
    %65 = vector.load %arg6[%c0_26, %c0_27] : memref<1x64xf32, #tpu.memory_space<vmem>>, vector<1x64xf32>
    %66 = vector.broadcast %65 : vector<1x64xf32> to vector<2x64xf32>
    %67 = arith.addf %64, %66 : vector<2x64xf32>
    %cst_28 = arith.constant 0.000000e+00 : f32
    %68 = vector.broadcast %cst_28 : f32 to vector<2x64xf32>
    %69 = arith.maximumf %67, %68 : vector<2x64xf32>
    %c0_29 = arith.constant 0 : index
    %c0_30 = arith.constant 0 : index
    %70 = vector.load %arg7[%c0_29, %c0_30] : memref<64x64xf32, #tpu.memory_space<vmem>>, vector<64x64xf32>
    %cst_31 = arith.constant dense<0.000000e+00> : vector<2x64xf32>
    %71 = tpu.matmul %69, %70, %cst_31 {dimension_numbers = #tpu.dot_dimension_numbers<[1], [0], [0], [1], [0, 0, 1, 1], [], []>} : vector<2x64xf32>, vector<64x64xf32>, vector<2x64xf32> -> vector<2x64xf32>
    %c0_32 = arith.constant 0 : index
    %c0_33 = arith.constant 0 : index
    %72 = vector.load %arg8[%c0_32, %c0_33] : memref<1x64xf32, #tpu.memory_space<vmem>>, vector<1x64xf32>
    %73 = vector.broadcast %72 : vector<1x64xf32> to vector<2x64xf32>
    %74 = arith.addf %71, %73 : vector<2x64xf32>
    %cst_34 = arith.constant 0.000000e+00 : f32
    %75 = vector.broadcast %cst_34 : f32 to vector<2x64xf32>
    %76 = arith.maximumf %74, %75 : vector<2x64xf32>
    %c0_35 = arith.constant 0 : index
    %c0_36 = arith.constant 0 : index
    %77 = vector.load %arg9[%c0_35, %c0_36] : memref<64x1xf32, #tpu.memory_space<vmem>>, vector<64x1xf32>
    %cst_37 = arith.constant dense<0.000000e+00> : vector<2x1xf32>
    %78 = tpu.matmul %76, %77, %cst_37 {dimension_numbers = #tpu.dot_dimension_numbers<[1], [0], [0], [1], [0, 0, 1, 1], [], []>} : vector<2x64xf32>, vector<64x1xf32>, vector<2x1xf32> -> vector<2x1xf32>
    %c0_38 = arith.constant 0 : index
    %c0_39 = arith.constant 0 : index
    %79 = vector.load %arg10[%c0_38, %c0_39] : memref<1x1xf32, #tpu.memory_space<vmem>>, vector<1x1xf32>
    %80 = vector.broadcast %79 : vector<1x1xf32> to vector<2x1xf32>
    %81 = arith.addf %78, %80 : vector<2x1xf32>
    %c0_40 = arith.constant 0 : index
    %c0_41 = arith.constant 0 : index
    %82 = vector.load %arg11[%c0_40, %c0_41] : memref<2x1xf32, #tpu.memory_space<vmem>>, vector<2x1xf32>
    tpu.vector_store %arg11[%c0_40, %c0_41], %81 {strides = array<i32>} : memref<2x1xf32, #tpu.memory_space<vmem>>, vector<2x1xf32>,
    return
  }
}

</mosaic_0001>

<llo_original>
// kernel: tpu_custom_call.1
$region0: #{tpu_custom_call.1}
  #allocation0 [shape = 'u32[]', space=smem, size = 0x4, offset = 0x4, fixed_abs, tag = 'smem constant byte address 0x4 - core index']
  #allocation1 [shape = 'u32[144,128]{1,0:T(1,128)}', space=vmem, size = 0x12000, scoped, tag = 'internal scratch']
  #allocation2 [shape = 'f32[1,1]{1,0:T(1,128)S(1)}', space=vmem, size = 0x200, scoped, tag = 'scoped memory for tpu_custom_call.1']
  %s0 = inlined_call_operand.vmem [shape: f32[64,16], index: 0, kind: input, shape index: {}]
  %s1 = inlined_call_operand.hbm [shape: f32[16,32], index: 1, kind: input, shape index: {}]
  %s2 = inlined_call_operand.vmem [shape: f32[1,32], index: 2, kind: input, shape index: {}]
  %s3 = inlined_call_operand.vmem [shape: f32[32,32], index: 3, kind: input, shape index: {}]
  %s4 = inlined_call_operand.vmem [shape: f32[1,32], index: 4, kind: input, shape index: {}]
  %s5 = inlined_call_operand.vmem [shape: f32[4,32,64], index: 5, kind: input, shape index: {}]
  %s6 = inlined_call_operand.vmem [shape: f32[1,64], index: 6, kind: input, shape index: {}]
  %s7 = inlined_call_operand.hbm [shape: f32[64,64], index: 7, kind: input, shape index: {}]
  %s8 = inlined_call_operand.vmem [shape: f32[1,64], index: 8, kind: input, shape index: {}]
  %s9 = inlined_call_operand.vmem [shape: f32[64,1], index: 9, kind: input, shape index: {}]
  %s10 = inlined_call_operand.<no memory space> [shape: f32[1,1], index: 10, kind: input, shape index: {}]
  %s11 = inlined_call_operand.vmem [shape: f32[2,1], index: 11, kind: output, shape index: {}]
  %s12 = sld [smem:[#allocation0]]
  $region62: #{tpu_custom_call.1} parent=0
    _
  %s14 = ssub.s32 1, %s12
  %s15 = scalar_select 0, %s14, %s12
  %v16 = vstv %s10
  %17 = vst [vmem:[#allocation2] sm:$0x1] %v16
  $region1: #{tpu_custom_call.1} parent=0
    #allocation3 [shape = 'u8[8192]{0}', space=vmem, size = 0x2000, scoped, tag = 'input window, operand 1, single buffered']
    #allocation4 [shape = 's32[1]{0}', space=sflag, size = 0x4, scoped, tag = 'scoped memory for tpu_custom_call.1']
    #allocation5 [shape = 'u8[32768]{0}', space=vmem, size = 0x8000, scoped, tag = 'input window, operand 7, single buffered']
    #allocation6 [shape = 's32[1]{0}', space=sflag, size = 0x4, scoped, tag = 'scoped memory for tpu_custom_call.1']
    %18 = vsyncpa [#allocation4], 0
    %19 = vsyncpa [#allocation6], 0
    // Predicated region
    $region2: #{tpu_custom_call.1} parent=1 // pred_check
      _
    $region3: #{tpu_custom_call.1} parent=1 // pred_check_branch
      %21 = sbr.rel (0) target = $region5
    $region4: #{tpu_custom_call.1} parent=1 // pred_region
      _
    $region5: #{tpu_custom_call.1} parent=1 // pred_fallthru
      _
    // Predicated region
    $region6: #{tpu_custom_call.1} parent=1 // pred_check
      _
    $region7: #{tpu_custom_call.1} parent=1 // pred_check_branch
      %23 = sbr.rel (0) target = $region9
    $region8: #{tpu_custom_call.1} parent=1 // pred_region
      %s25 = ssub.s32 256, 256
      %26 = vsyncadd [#allocation4], %s25
      %s27 = sshll.u32 [#allocation3], 4
      %s28 = int_to_ptr.vmem [resolvable:$true] %s27
      %33 = dma.hbm_to_vmem [thread:$0]  %s1, 256, %s28, [#allocation4], 128, 128, 8
    $region9: #{tpu_custom_call.1} parent=1 // pred_fallthru
      _
    // Predicated region
    $region10: #{tpu_custom_call.1} parent=1 // pred_check
      _
    $region11: #{tpu_custom_call.1} parent=1 // pred_check_branch
      %35 = sbr.rel (0) target = $region13
    $region12: #{tpu_custom_call.1} parent=1 // pred_region
      _
    $region13: #{tpu_custom_call.1} parent=1 // pred_fallthru
      _
    // Predicated region
    $region14: #{tpu_custom_call.1} parent=1 // pred_check
      _
    $region15: #{tpu_custom_call.1} parent=1 // pred_check_branch
      %37 = sbr.rel (0) target = $region17
    $region16: #{tpu_custom_call.1} parent=1 // pred_region
      _
    $region17: #{tpu_custom_call.1} parent=1 // pred_fallthru
      _
    // Predicated region
    $region18: #{tpu_custom_call.1} parent=1 // pred_check
      _
    $region19: #{tpu_custom_call.1} parent=1 // pred_check_branch
      %39 = sbr.rel (0) target = $region21
    $region20: #{tpu_custom_call.1} parent=1 // pred_region
      _
    $region21: #{tpu_custom_call.1} parent=1 // pred_fallthru
      _
    // Predicated region
    $region22: #{tpu_custom_call.1} parent=1 // pred_check
      _
    $region23: #{tpu_custom_call.1} parent=1 // pred_check_branch
      %41 = sbr.rel (0) target = $region25
    $region24: #{tpu_custom_call.1} parent=1 // pred_region
      _
    $region25: #{tpu_custom_call.1} parent=1 // pred_fallthru
      _
    // Predicated region
    $region26: #{tpu_custom_call.1} parent=1 // pred_check
      _
    $region27: #{tpu_custom_call.1} parent=1 // pred_check_branch
      %43 = sbr.rel (0) target = $region29
    $region28: #{tpu_custom_call.1} parent=1 // pred_region
      _
    $region29: #{tpu_custom_call.1} parent=1 // pred_fallthru
      _
    // Predicated region
    $region30: #{tpu_custom_call.1} parent=1 // pred_check
      _
    $region31: #{tpu_custom_call.1} parent=1 // pred_check_branch
      %45 = sbr.rel (0) target = $region33
    $region32: #{tpu_custom_call.1} parent=1 // pred_region
      %s47 = ssub.s32 1024, 1024
      %48 = vsyncadd [#allocation6], %s47
      %s49 = sshll.u32 [#allocation5], 4
      %s50 = int_to_ptr.vmem [resolvable:$true] %s49
      %55 = dma.hbm_to_vmem [thread:$0]  %s7, 1024, %s50, [#allocation6], 128, 128, 8
    $region33: #{tpu_custom_call.1} parent=1 // pred_fallthru
      _
    // Predicated region
    $region34: #{tpu_custom_call.1} parent=1 // pred_check
      _
    $region35: #{tpu_custom_call.1} parent=1 // pred_check_branch
      %57 = sbr.rel (0) target = $region37
    $region36: #{tpu_custom_call.1} parent=1 // pred_region
      _
    $region37: #{tpu_custom_call.1} parent=1 // pred_fallthru
      _
    // Predicated region
    $region38: #{tpu_custom_call.1} parent=1 // pred_check
      _
    $region39: #{tpu_custom_call.1} parent=1 // pred_check_branch
      %59 = sbr.rel (0) target = $region41
    $region40: #{tpu_custom_call.1} parent=1 // pred_region
      _
    $region41: #{tpu_custom_call.1} parent=1 // pred_fallthru
      _
    // Predicated region
    $region42: #{tpu_custom_call.1} parent=1 // pred_check
      _
    $region43: #{tpu_custom_call.1} parent=1 // pred_check_branch
      %61 = sbr.rel (0) target = $region45
    $region44: #{tpu_custom_call.1} parent=1 // pred_region
      _
    $region45: #{tpu_custom_call.1} parent=1 // pred_fallthru
      _
    // Predicated region
    $region46: #{tpu_custom_call.1} parent=1 // pred_check
      _
    $region47: #{tpu_custom_call.1} parent=1 // pred_check_branch
      %63 = sbr.rel (0) target = $region49
    $region48: #{tpu_custom_call.1} parent=1 // pred_region
      %64 = dma.done [#allocation4], 256
    $region49: #{tpu_custom_call.1} parent=1 // pred_fallthru
      _
    // Predicated region
    $region50: #{tpu_custom_call.1} parent=1 // pred_check
      _
    $region51: #{tpu_custom_call.1} parent=1 // pred_check_branch
      %66 = sbr.rel (0) target = $region53
    $region52: #{tpu_custom_call.1} parent=1 // pred_region
      %67 = dma.done [#allocation6], 1024
    $region53: #{tpu_custom_call.1} parent=1 // pred_fallthru
      _
    %v68 = vld [vmem:[%s0] sm:$0xff]
    %v69 = vld [vmem:[%s0 + $0x8] sm:$0xff]
    %v70 = vld [vmem:[%s0 + $0x10] sm:$0xff]
    %v71 = vld [vmem:[%s0 + $0x18] sm:$0xff]
    %v72 = vld [vmem:[%s0 + $0x20] sm:$0xff]
    %v73 = vld [vmem:[%s0 + $0x28] sm:$0xff]
    %v74 = vld [vmem:[%s0 + $0x30] sm:$0xff]
    %v75 = vld [vmem:[%s0 + $0x38] sm:$0xff]
    %v76 = vld [vmem:[#allocation3] sm:$0xff]
    %v77 = vld [vmem:[#allocation3 + $0x8] sm:$0xff]
    %v78 = vld [vmem:[%s2] sm:$0x1]
    %v80 = vlaneseq
    %v81 = vshrl.u32 %v80, 7
    %v82 = vsub.s32 0, %v81
    %v83 = vrot.slane %v78, %v82
    %vm85 = vcmask 130048
    %v87 = vsel %vm85, %v68, 0
    %v90 = vsel %vm85, %v69, 0
    %v93 = vsel %vm85, %v70, 0
    %v96 = vsel %vm85, %v71, 0
    %v99 = vsel %vm85, %v72, 0
    %v102 = vsel %vm85, %v73, 0
    %v105 = vsel %vm85, %v74, 0
    %v108 = vsel %vm85, %v75, 0
    %110 = vmatprep.subr.mxu0 0.0
    %111 = vmatpush1.msra.mxu0 %v76
    %112 = vmatprep.subr.mxu0 0.0
    %113 = vmatpush1.msra.mxu0 %v77
    %114 = vmatprep.subr.mxu0 0.0
    %115 = vmatpush1.msra.mxu0 0.0
    %116 = vmatprep.subr.mxu0 0.0
    %117 = vmatpush1.msra.mxu0 0.0
    %118 = vmatprep.subr.mxu0 0.0
    %119 = vmatpush1.msra.mxu0 0.0
    %120 = vmatprep.subr.mxu0 0.0
    %121 = vmatpush1.msra.mxu0 0.0
    %122 = vmatprep.subr.mxu0 0.0
    %123 = vmatpush1.msra.mxu0 0.0
    %124 = vmatprep.subr.mxu0 0.0
    %125 = vmatpush1.msra.mxu0 0.0
    %126 = vmatprep.subr.mxu0 0.0
    %127 = vmatpush1.msra.mxu0 0.0
    %128 = vmatprep.subr.mxu0 0.0
    %129 = vmatpush1.msra.mxu0 0.0
    %130 = vmatprep.subr.mxu0 0.0
    %131 = vmatpush1.msra.mxu0 0.0
    %132 = vmatprep.subr.mxu0 0.0
    %133 = vmatpush1.msra.mxu0 0.0
    %134 = vmatprep.subr.mxu0 0.0
    %135 = vmatpush1.msra.mxu0 0.0
    %136 = vmatprep.subr.mxu0 0.0
    %137 = vmatpush1.msra.mxu0 0.0
    %138 = vmatprep.subr.mxu0 0.0
    %139 = vmatpush1.msra.mxu0 0.0
    %140 = vmatprep.subr.mxu0 0.0
    %141 = vmatpush1.msra.mxu0 0.0
    %142 = vmatprep.subr.mxu0 0.0
    %143 = vmatpush1.msra.mxu0 0.0
    %144 = vmatprep.subr.mxu0 0.0
    %145 = vmatpush1.msra.mxu0 0.0
    %146 = vmatprep.subr.mxu0 0.0
    %147 = vmatpush1.msra.mxu0 0.0
    %148 = vmatprep.subr.mxu0 0.0
    %149 = vmatpush1.msra.mxu0 0.0
    %150 = vmatprep.subr.mxu0 0.0
    %151 = vmatpush1.msra.mxu0 0.0
    %152 = vmatprep.subr.mxu0 0.0
    %153 = vmatpush1.msra.mxu0 0.0
    %154 = vmatprep.subr.mxu0 0.0
    %155 = vmatpush1.msra.mxu0 0.0
    %156 = vmatprep.subr.mxu0 0.0
    %157 = vmatpush1.msra.mxu0 0.0
    %158 = vmatprep.subr.mxu0 0.0
    %159 = vmatpush1.msra.mxu0 0.0
    %160 = vmatprep.subr.mxu0 0.0
    %161 = vmatpush1.msra.mxu0 0.0
    %162 = vmatprep.subr.mxu0 0.0
    %163 = vmatpush1.msra.mxu0 0.0
    %164 = vmatprep.subr.mxu0 0.0
    %165 = vmatpush1.msra.mxu0 0.0
    %166 = vmatprep.subr.mxu0 0.0
    %167 = vmatpush1.msra.mxu0 0.0
    %168 = vmatprep.subr.mxu0 0.0
    %169 = vmatpush1.msra.mxu0 0.0
    %170 = vmatprep.subr.mxu0 0.0
    %171 = vmatpush1.msra.mxu0 0.0
    %172 = vmatprep.subr.mxu0 0.0
    %173 = vmatpush1.msra.mxu0 0.0
    %174 = vmatprep.mubr.f32.mxu0 0.0
    %175 = vmatmul.mubr.f32.gmra.mrb[0].mxu0 %v87
    %v176 = vpop.f32.mrb[0].mxu0
    %v177 = vadd.f32 %v83, %v176
    %v178 = vpop.f32.mrb[0].mxu0
    %179 = vmatprep.mubr.f32.mxu0 0.0
    %180 = vmatmul.mubr.f32.gmra.mrb[0].mxu0 %v90
    %v181 = vpop.f32.mrb[0].mxu0
    %v182 = vadd.f32 %v83, %v181
    %v183 = vpop.f32.mrb[0].mxu0
    %184 = vmatprep.mubr.f32.mxu0 0.0
    %185 = vmatmul.mubr.f32.gmra.mrb[0].mxu0 %v93
    %v186 = vpop.f32.mrb[0].mxu0
    %v187 = vadd.f32 %v83, %v186
    %v188 = vpop.f32.mrb[0].mxu0
    %189 = vmatprep.mubr.f32.mxu0 0.0
    %190 = vmatmul.mubr.f32.gmra.mrb[0].mxu0 %v96
    %v191 = vpop.f32.mrb[0].mxu0
    %v192 = vadd.f32 %v83, %v191
    %v193 = vpop.f32.mrb[0].mxu0
    %194 = vmatprep.mubr.f32.mxu0 0.0
    %195 = vmatmul.mubr.f32.gmra.mrb[0].mxu0 %v99
    %v196 = vpop.f32.mrb[0].mxu0
    %v197 = vadd.f32 %v83, %v196
    %v198 = vpop.f32.mrb[0].mxu0
    %199 = vmatprep.mubr.f32.mxu0 0.0
    %200 = vmatmul.mubr.f32.gmra.mrb[0].mxu0 %v102
    %v201 = vpop.f32.mrb[0].mxu0
    %v202 = vadd.f32 %v83, %v201
    %v203 = vpop.f32.mrb[0].mxu0
    %204 = vmatprep.mubr.f32.mxu0 0.0
    %205 = vmatmul.mubr.f32.gmra.mrb[0].mxu0 %v105
    %v206 = vpop.f32.mrb[0].mxu0
    %v207 = vadd.f32 %v83, %v206
    %v208 = vpop.f32.mrb[0].mxu0
    %209 = vmatprep.mubr.f32.mxu0 0.0
    %210 = vmatmul.mubr.f32.gmra.mrb[0].mxu0 %v108
    %v211 = vpop.f32.mrb[0].mxu0
    %v212 = vadd.f32 %v83, %v211
    %v213 = vpop.f32.mrb[0].mxu0
    %214 = vdwg.mxu0
    %v215 = vmax.f32 %v177, 0.0
    %v216 = vmax.f32 %v182, 0.0
    %v217 = vmax.f32 %v187, 0.0
    %v218 = vmax.f32 %v192, 0.0
    %v219 = vmax.f32 %v197, 0.0
    %v220 = vmax.f32 %v202, 0.0
    %v221 = vmax.f32 %v207, 0.0
    %v222 = vmax.f32 %v212, 0.0
    %v231 = vrot.slane %v215, 1
    %v232 = vrot.slane %v216, 1
    %v233 = vrot.slane %v217, 1
    %v234 = vrot.slane %v218, 1
    %v235 = vrot.slane %v219, 1
    %v236 = vrot.slane %v220, 1
    %v237 = vrot.slane %v221, 1
    %v238 = vrot.slane %v222, 1
    %v247 = vadd.f32 %v215, %v231
    %v248 = vadd.f32 %v216, %v232
    %v249 = vadd.f32 %v217, %v233
    %v250 = vadd.f32 %v218, %v234
    %v251 = vadd.f32 %v219, %v235
    %v252 = vadd.f32 %v220, %v236
    %v253 = vadd.f32 %v221, %v237
    %v254 = vadd.f32 %v222, %v238
    %v255 = vrot.slane %v215, 2
    %v256 = vrot.slane %v216, 2
    %v257 = vrot.slane %v217, 2
    %v258 = vrot.slane %v218, 2
    %v259 = vrot.slane %v219, 2
    %v260 = vrot.slane %v220, 2
    %v261 = vrot.slane %v221, 2
    %v262 = vrot.slane %v222, 2
    %v271 = vadd.f32 %v247, %v255
    %v272 = vadd.f32 %v248, %v256
    %v273 = vadd.f32 %v249, %v257
    %v274 = vadd.f32 %v250, %v258
    %v275 = vadd.f32 %v251, %v259
    %v276 = vadd.f32 %v252, %v260
    %v277 = vadd.f32 %v253, %v261
    %v278 = vadd.f32 %v254, %v262
    %v279 = vrot.slane %v215, 3
    %v280 = vrot.slane %v216, 3
    %v281 = vrot.slane %v217, 3
    %v282 = vrot.slane %v218, 3
    %v283 = vrot.slane %v219, 3
    %v284 = vrot.slane %v220, 3
    %v285 = vrot.slane %v221, 3
    %v286 = vrot.slane %v222, 3
    %v295 = vadd.f32 %v271, %v279
    %v296 = vadd.f32 %v272, %v280
    %v297 = vadd.f32 %v273, %v281
    %v298 = vadd.f32 %v274, %v282
    %v299 = vadd.f32 %v275, %v283
    %v300 = vadd.f32 %v276, %v284
    %v301 = vadd.f32 %v277, %v285
    %v302 = vadd.f32 %v278, %v286
    %v303 = vrot.slane %v215, 4
    %v304 = vrot.slane %v216, 4
    %v305 = vrot.slane %v217, 4
    %v306 = vrot.slane %v218, 4
    %v307 = vrot.slane %v219, 4
    %v308 = vrot.slane %v220, 4
    %v309 = vrot.slane %v221, 4
    %v310 = vrot.slane %v222, 4
    %v319 = vadd.f32 %v295, %v303
    %v320 = vadd.f32 %v296, %v304
    %v321 = vadd.f32 %v297, %v305
    %v322 = vadd.f32 %v298, %v306
    %v323 = vadd.f32 %v299, %v307
    %v324 = vadd.f32 %v300, %v308
    %v325 = vadd.f32 %v301, %v309
    %v326 = vadd.f32 %v302, %v310
    %v327 = vrot.slane %v215, 5
    %v328 = vrot.slane %v216, 5
    %v329 = vrot.slane %v217, 5
    %v330 = vrot.slane %v218, 5
    %v331 = vrot.slane %v219, 5
    %v332 = vrot.slane %v220, 5
    %v333 = vrot.slane %v221, 5
    %v334 = vrot.slane %v222, 5
    %v343 = vadd.f32 %v319, %v327
    %v344 = vadd.f32 %v320, %v328
    %v345 = vadd.f32 %v321, %v329
    %v346 = vadd.f32 %v322, %v330
    %v347 = vadd.f32 %v323, %v331
    %v348 = vadd.f32 %v324, %v332
    %v349 = vadd.f32 %v325, %v333
    %v350 = vadd.f32 %v326, %v334
    %v351 = vrot.slane %v215, 6
    %v352 = vrot.slane %v216, 6
    %v353 = vrot.slane %v217, 6
    %v354 = vrot.slane %v218, 6
    %v355 = vrot.slane %v219, 6
    %v356 = vrot.slane %v220, 6
    %v357 = vrot.slane %v221, 6
    %v358 = vrot.slane %v222, 6
    %v367 = vadd.f32 %v343, %v351
    %v368 = vadd.f32 %v344, %v352
    %v369 = vadd.f32 %v345, %v353
    %v370 = vadd.f32 %v346, %v354
    %v371 = vadd.f32 %v347, %v355
    %v372 = vadd.f32 %v348, %v356
    %v373 = vadd.f32 %v349, %v357
    %v374 = vadd.f32 %v350, %v358
    %v375 = vrot.slane %v215, 7
    %v376 = vrot.slane %v216, 7
    %v377 = vrot.slane %v217, 7
    %v378 = vrot.slane %v218, 7
    %v379 = vrot.slane %v219, 7
    %v380 = vrot.slane %v220, 7
    %v381 = vrot.slane %v221, 7
    %v382 = vrot.slane %v222, 7
    %v391 = vadd.f32 %v367, %v375
    %v392 = vadd.f32 %v368, %v376
    %v393 = vadd.f32 %v369, %v377
    %v394 = vadd.f32 %v370, %v378
    %v395 = vadd.f32 %v371, %v379
    %v396 = vadd.f32 %v372, %v380
    %v397 = vadd.f32 %v373, %v381
    %v398 = vadd.f32 %v374, %v382
    %v399 = vld [vmem:[%s3] sm:$0xff]
    %v400 = vld [vmem:[%s3 + $0x8] sm:$0xff]
    %v401 = vld [vmem:[%s3 + $0x10] sm:$0xff]
    %v402 = vld [vmem:[%s3 + $0x18] sm:$0xff]
    %v403 = vld [vmem:[%s4] sm:$0x1]
    %v405 = vlaneseq
    %v406 = vshrl.u32 %v405, 7
    %v407 = vsub.s32 0, %v406
    %v408 = vrot.slane %v403, %v407
    %v418 = vrot.slane %v392, 7
    %vm419 = vcmask 1041409
    %v420 = vsel %vm419, %v418, %v391
    %v421 = vrot.slane %v393, 6
    %vm422 = vcmask 1042434
    %v423 = vsel %vm422, %v421, %v420
    %v424 = vrot.slane %v394, 5
    %vm425 = vcmask 1043459
    %v426 = vsel %vm425, %v424, %v423
    %v427 = vrot.slane %v395, 4
    %vm428 = vcmask 1044484
    %v429 = vsel %vm428, %v427, %v426
    %v430 = vrot.slane %v396, 3
    %vm431 = vcmask 1045509
    %v432 = vsel %vm431, %v430, %v429
    %v433 = vrot.slane %v397, 2
    %vm434 = vcmask 1046534
    %v435 = vsel %vm434, %v433, %v432
    %v436 = vrot.slane %v398, 1
    %vm437 = vcmask 1047559
    %v438 = vsel %vm437, %v436, %v435
    %vm439 = vcmask 261120
    %v440 = vsel %vm439, %v438, 0
    %442 = vmatprep.subr.mxu0 0.0
    %443 = vmatpush1.msra.mxu0 %v399
    %444 = vmatprep.subr.mxu0 0.0
    %445 = vmatpush1.msra.mxu0 %v400
    %446 = vmatprep.subr.mxu0 0.0
    %447 = vmatpush1.msra.mxu0 %v401
    %448 = vmatprep.subr.mxu0 0.0
    %449 = vmatpush1.msra.mxu0 %v402
    %450 = vmatprep.subr.mxu0 0.0
    %451 = vmatpush1.msra.mxu0 0.0
    %452 = vmatprep.subr.mxu0 0.0
    %453 = vmatpush1.msra.mxu0 0.0
    %454 = vmatprep.subr.mxu0 0.0
    %455 = vmatpush1.msra.mxu0 0.0
    %456 = vmatprep.subr.mxu0 0.0
    %457 = vmatpush1.msra.mxu0 0.0
    %458 = vmatprep.subr.mxu0 0.0
    %459 = vmatpush1.msra.mxu0 0.0
    %460 = vmatprep.subr.mxu0 0.0
    %461 = vmatpush1.msra.mxu0 0.0
    %462 = vmatprep.subr.mxu0 0.0
    %463 = vmatpush1.msra.mxu0 0.0
    %464 = vmatprep.subr.mxu0 0.0
    %465 = vmatpush1.msra.mxu0 0.0
    %466 = vmatprep.subr.mxu0 0.0
    %467 = vmatpush1.msra.mxu0 0.0
    %468 = vmatprep.subr.mxu0 0.0
    %469 = vmatpush1.msra.mxu0 0.0
    %470 = vmatprep.subr.mxu0 0.0
    %471 = vmatpush1.msra.mxu0 0.0
    %472 = vmatprep.subr.mxu0 0.0
    %473 = vmatpush1.msra.mxu0 0.0
    %474 = vmatprep.subr.mxu0 0.0
    %475 = vmatpush1.msra.mxu0 0.0
    %476 = vmatprep.subr.mxu0 0.0
    %477 = vmatpush1.msra.mxu0 0.0
    %478 = vmatprep.subr.mxu0 0.0
    %479 = vmatpush1.msra.mxu0 0.0
    %480 = vmatprep.subr.mxu0 0.0
    %481 = vmatpush1.msra.mxu0 0.0
    %482 = vmatprep.subr.mxu0 0.0
    %483 = vmatpush1.msra.mxu0 0.0
    %484 = vmatprep.subr.mxu0 0.0
    %485 = vmatpush1.msra.mxu0 0.0
    %486 = vmatprep.subr.mxu0 0.0
    %487 = vmatpush1.msra.mxu0 0.0
    %488 = vmatprep.subr.mxu0 0.0
    %489 = vmatpush1.msra.mxu0 0.0
    %490 = vmatprep.subr.mxu0 0.0
    %491 = vmatpush1.msra.mxu0 0.0
    %492 = vmatprep.subr.mxu0 0.0
    %493 = vmatpush1.msra.mxu0 0.0
    %494 = vmatprep.subr.mxu0 0.0
    %495 = vmatpush1.msra.mxu0 0.0
    %496 = vmatprep.subr.mxu0 0.0
    %497 = vmatpush1.msra.mxu0 0.0
    %498 = vmatprep.subr.mxu0 0.0
    %499 = vmatpush1.msra.mxu0 0.0
    %500 = vmatprep.subr.mxu0 0.0
    %501 = vmatpush1.msra.mxu0 0.0
    %502 = vmatprep.subr.mxu0 0.0
    %503 = vmatpush1.msra.mxu0 0.0
    %504 = vmatprep.subr.mxu0 0.0
    %505 = vmatpush1.msra.mxu0 0.0
    %506 = vmatprep.mubr.f32.mxu0 0.0
    %507 = vmatmul.mubr.f32.gmra.mrb[0].mxu0 %v440
    %v508 = vpop.f32.mrb[0].mxu0
    %v509 = vadd.f32 %v408, %v508
    %v510 = vpop.f32.mrb[0].mxu0
    %511 = vdwg.mxu0
    %v512 = vmax.f32 %v509, 0.0
    %v514 = vcombine.high %v512, %v512
    %v515 = vld [vmem:[%s5] sm:$0xff]
    %v516 = vld [vmem:[%s5 + $0x8] sm:$0xff]
    %v517 = vld [vmem:[%s5 + $0x10] sm:$0xff]
    %v518 = vld [vmem:[%s5 + $0x18] sm:$0xff]
    %s519 = scalar_lea.vmem %s5, 32
    %v520 = vld [vmem:[%s519] sm:$0xff]
    %v521 = vld [vmem:[%s519 + $0x8] sm:$0xff]
    %v522 = vld [vmem:[%s519 + $0x10] sm:$0xff]
    %v523 = vld [vmem:[%s519 + $0x18] sm:$0xff]
    %v524 = vlaneseq
    %v525 = vshrl.u32 %v524, 7
    %v526 = vsub.s32 1, %v525
    %v527 = vrot.slane %v512, %v526
    %v528 = vlaneseq
    %v529 = vshrl.u32 %v528, 7
    %v530 = vsub.s32 1, %v529
    %v531 = vrot.slane %v514, %v530
    %v532 = vsel %vm419, %v531, %v527
    %v533 = vsel %vm439, %v532, 0
    %535 = vmatprep.subr.mxu0 0.0
    %536 = vmatpush1.msra.mxu0 %v520
    %537 = vmatprep.subr.mxu0 0.0
    %538 = vmatpush1.msra.mxu0 %v521
    %539 = vmatprep.subr.mxu0 0.0
    %540 = vmatpush1.msra.mxu0 %v522
    %541 = vmatprep.subr.mxu0 0.0
    %542 = vmatpush1.msra.mxu0 %v523
    %543 = vmatprep.subr.mxu0 0.0
    %544 = vmatpush1.msra.mxu0 0.0
    %545 = vmatprep.subr.mxu0 0.0
    %546 = vmatpush1.msra.mxu0 0.0
    %547 = vmatprep.subr.mxu0 0.0
    %548 = vmatpush1.msra.mxu0 0.0
    %549 = vmatprep.subr.mxu0 0.0
    %550 = vmatpush1.msra.mxu0 0.0
    %551 = vmatprep.subr.mxu0 0.0
    %552 = vmatpush1.msra.mxu0 0.0
    %553 = vmatprep.subr.mxu0 0.0
    %554 = vmatpush1.msra.mxu0 0.0
    %555 = vmatprep.subr.mxu0 0.0
    %556 = vmatpush1.msra.mxu0 0.0
    %557 = vmatprep.subr.mxu0 0.0
    %558 = vmatpush1.msra.mxu0 0.0
    %559 = vmatprep.subr.mxu0 0.0
    %560 = vmatpush1.msra.mxu0 0.0
    %561 = vmatprep.subr.mxu0 0.0
    %562 = vmatpush1.msra.mxu0 0.0
    %563 = vmatprep.subr.mxu0 0.0
    %564 = vmatpush1.msra.mxu0 0.0
    %565 = vmatprep.subr.mxu0 0.0
    %566 = vmatpush1.msra.mxu0 0.0
    %567 = vmatprep.subr.mxu0 0.0
    %568 = vmatpush1.msra.mxu0 0.0
    %569 = vmatprep.subr.mxu0 0.0
    %570 = vmatpush1.msra.mxu0 0.0
    %571 = vmatprep.subr.mxu0 0.0
    %572 = vmatpush1.msra.mxu0 0.0
    %573 = vmatprep.subr.mxu0 0.0
    %574 = vmatpush1.msra.mxu0 0.0
    %575 = vmatprep.subr.mxu0 0.0
    %576 = vmatpush1.msra.mxu0 0.0
    %577 = vmatprep.subr.mxu0 0.0
    %578 = vmatpush1.msra.mxu0 0.0
    %579 = vmatprep.subr.mxu0 0.0
    %580 = vmatpush1.msra.mxu0 0.0
    %581 = vmatprep.subr.mxu0 0.0
    %582 = vmatpush1.msra.mxu0 0.0
    %583 = vmatprep.subr.mxu0 0.0
    %584 = vmatpush1.msra.mxu0 0.0
    %585 = vmatprep.subr.mxu0 0.0
    %586 = vmatpush1.msra.mxu0 0.0
    %587 = vmatprep.subr.mxu0 0.0
    %588 = vmatpush1.msra.mxu0 0.0
    %589 = vmatprep.subr.mxu0 0.0
    %590 = vmatpush1.msra.mxu0 0.0
    %591 = vmatprep.subr.mxu0 0.0
    %592 = vmatpush1.msra.mxu0 0.0
    %593 = vmatprep.subr.mxu0 0.0
    %594 = vmatpush1.msra.mxu0 0.0
    %595 = vmatprep.subr.mxu0 0.0
    %596 = vmatpush1.msra.mxu0 0.0
    %597 = vmatprep.subr.mxu0 0.0
    %598 = vmatpush1.msra.mxu0 0.0
    %599 = vmatprep.mubr.f32.mxu0 0.0
    %600 = vmatmul.mubr.f32.gmra.mrb[0].mxu0 %v533
    %v601 = vpop.f32.mrb[0].mxu0
    %v602 = vadd.f32 0.0, %v601
    %v603 = vpop.f32.mrb[0].mxu0
    %604 = vdwg.mxu0
    %v605 = vlaneseq
    %v606 = vshrl.u32 %v605, 7
    %v607 = vsub.s32 0, %v606
    %v608 = vrot.slane %v512, %v607
    %v609 = vlaneseq
    %v610 = vshrl.u32 %v609, 7
    %v611 = vsub.s32 0, %v610
    %v612 = vrot.slane %v514, %v611
    %v613 = vsel %vm419, %v612, %v608
    %v614 = vsel %vm439, %v613, 0
    %616 = vmatprep.subr.mxu0 0.0
    %617 = vmatpush1.msra.mxu0 %v515
    %618 = vmatprep.subr.mxu0 0.0
    %619 = vmatpush1.msra.mxu0 %v516
    %620 = vmatprep.subr.mxu0 0.0
    %621 = vmatpush1.msra.mxu0 %v517
    %622 = vmatprep.subr.mxu0 0.0
    %623 = vmatpush1.msra.mxu0 %v518
    %624 = vmatprep.subr.mxu0 0.0
    %625 = vmatpush1.msra.mxu0 0.0
    %626 = vmatprep.subr.mxu0 0.0
    %627 = vmatpush1.msra.mxu0 0.0
    %628 = vmatprep.subr.mxu0 0.0
    %629 = vmatpush1.msra.mxu0 0.0
    %630 = vmatprep.subr.mxu0 0.0
    %631 = vmatpush1.msra.mxu0 0.0
    %632 = vmatprep.subr.mxu0 0.0
    %633 = vmatpush1.msra.mxu0 0.0
    %634 = vmatprep.subr.mxu0 0.0
    %635 = vmatpush1.msra.mxu0 0.0
    %636 = vmatprep.subr.mxu0 0.0
    %637 = vmatpush1.msra.mxu0 0.0
    %638 = vmatprep.subr.mxu0 0.0
    %639 = vmatpush1.msra.mxu0 0.0
    %640 = vmatprep.subr.mxu0 0.0
    %641 = vmatpush1.msra.mxu0 0.0
    %642 = vmatprep.subr.mxu0 0.0
    %643 = vmatpush1.msra.mxu0 0.0
    %644 = vmatprep.subr.mxu0 0.0
    %645 = vmatpush1.msra.mxu0 0.0
    %646 = vmatprep.subr.mxu0 0.0
    %647 = vmatpush1.msra.mxu0 0.0
    %648 = vmatprep.subr.mxu0 0.0
    %649 = vmatpush1.msra.mxu0 0.0
    %650 = vmatprep.subr.mxu0 0.0
    %651 = vmatpush1.msra.mxu0 0.0
    %652 = vmatprep.subr.mxu0 0.0
    %653 = vmatpush1.msra.mxu0 0.0
    %654 = vmatprep.subr.mxu0 0.0
    %655 = vmatpush1.msra.mxu0 0.0
    %656 = vmatprep.subr.mxu0 0.0
    %657 = vmatpush1.msra.mxu0 0.0
    %658 = vmatprep.subr.mxu0 0.0
    %659 = vmatpush1.msra.mxu0 0.0
    %660 = vmatprep.subr.mxu0 0.0
    %661 = vmatpush1.msra.mxu0 0.0
    %662 = vmatprep.subr.mxu0 0.0
    %663 = vmatpush1.msra.mxu0 0.0
    %664 = vmatprep.subr.mxu0 0.0
    %665 = vmatpush1.msra.mxu0 0.0
    %666 = vmatprep.subr.mxu0 0.0
    %667 = vmatpush1.msra.mxu0 0.0
    %668 = vmatprep.subr.mxu0 0.0
    %669 = vmatpush1.msra.mxu0 0.0
    %670 = vmatprep.subr.mxu0 0.0
    %671 = vmatpush1.msra.mxu0 0.0
    %672 = vmatprep.subr.mxu0 0.0
    %673 = vmatpush1.msra.mxu0 0.0
    %674 = vmatprep.subr.mxu0 0.0
    %675 = vmatpush1.msra.mxu0 0.0
    %676 = vmatprep.subr.mxu0 0.0
    %677 = vmatpush1.msra.mxu0 0.0
    %678 = vmatprep.subr.mxu0 0.0
    %679 = vmatpush1.msra.mxu0 0.0
    %680 = vmatprep.mubr.f32.mxu0 0.0
    %681 = vmatmul.mubr.f32.gmra.mrb[0].mxu0 %v614
    %v682 = vpop.f32.mrb[0].mxu0
    %v683 = vadd.f32 %v602, %v682
    %v684 = vpop.f32.mrb[0].mxu0
    %685 = vdwg.mxu0
    %s686 = scalar_lea.vmem %s5, 64
    %v687 = vld [vmem:[%s686] sm:$0xff]
    %v688 = vld [vmem:[%s686 + $0x8] sm:$0xff]
    %v689 = vld [vmem:[%s686 + $0x10] sm:$0xff]
    %v690 = vld [vmem:[%s686 + $0x18] sm:$0xff]
    %v691 = vlaneseq
    %v692 = vshrl.u32 %v691, 7
    %v693 = vsub.s32 2, %v692
    %v694 = vrot.slane %v512, %v693
    %v695 = vlaneseq
    %v696 = vshrl.u32 %v695, 7
    %v697 = vsub.s32 2, %v696
    %v698 = vrot.slane %v514, %v697
    %v699 = vsel %vm419, %v698, %v694
    %v700 = vsel %vm439, %v699, 0
    %702 = vmatprep.subr.mxu0 0.0
    %703 = vmatpush1.msra.mxu0 %v687
    %704 = vmatprep.subr.mxu0 0.0
    %705 = vmatpush1.msra.mxu0 %v688
    %706 = vmatprep.subr.mxu0 0.0
    %707 = vmatpush1.msra.mxu0 %v689
    %708 = vmatprep.subr.mxu0 0.0
    %709 = vmatpush1.msra.mxu0 %v690
    %710 = vmatprep.subr.mxu0 0.0
    %711 = vmatpush1.msra.mxu0 0.0
    %712 = vmatprep.subr.mxu0 0.0
    %713 = vmatpush1.msra.mxu0 0.0
    %714 = vmatprep.subr.mxu0 0.0
    %715 = vmatpush1.msra.mxu0 0.0
    %716 = vmatprep.subr.mxu0 0.0
    %717 = vmatpush1.msra.mxu0 0.0
    %718 = vmatprep.subr.mxu0 0.0
    %719 = vmatpush1.msra.mxu0 0.0
    %720 = vmatprep.subr.mxu0 0.0
    %721 = vmatpush1.msra.mxu0 0.0
    %722 = vmatprep.subr.mxu0 0.0
    %723 = vmatpush1.msra.mxu0 0.0
    %724 = vmatprep.subr.mxu0 0.0
    %725 = vmatpush1.msra.mxu0 0.0
    %726 = vmatprep.subr.mxu0 0.0
    %727 = vmatpush1.msra.mxu0 0.0
    %728 = vmatprep.subr.mxu0 0.0
    %729 = vmatpush1.msra.mxu0 0.0
    %730 = vmatprep.subr.mxu0 0.0
    %731 = vmatpush1.msra.mxu0 0.0
    %732 = vmatprep.subr.mxu0 0.0
    %733 = vmatpush1.msra.mxu0 0.0
    %734 = vmatprep.subr.mxu0 0.0
    %735 = vmatpush1.msra.mxu0 0.0
    %736 = vmatprep.subr.mxu0 0.0
    %737 = vmatpush1.msra.mxu0 0.0
    %738 = vmatprep.subr.mxu0 0.0
    %739 = vmatpush1.msra.mxu0 0.0
    %740 = vmatprep.subr.mxu0 0.0
    %741 = vmatpush1.msra.mxu0 0.0
    %742 = vmatprep.subr.mxu0 0.0
    %743 = vmatpush1.msra.mxu0 0.0
    %744 = vmatprep.subr.mxu0 0.0
    %745 = vmatpush1.msra.mxu0 0.0
    %746 = vmatprep.subr.mxu0 0.0
    %747 = vmatpush1.msra.mxu0 0.0
    %748 = vmatprep.subr.mxu0 0.0
    %749 = vmatpush1.msra.mxu0 0.0
    %750 = vmatprep.subr.mxu0 0.0
    %751 = vmatpush1.msra.mxu0 0.0
    %752 = vmatprep.subr.mxu0 0.0
    %753 = vmatpush1.msra.mxu0 0.0
    %754 = vmatprep.subr.mxu0 0.0
    %755 = vmatpush1.msra.mxu0 0.0
    %756 = vmatprep.subr.mxu0 0.0
    %757 = vmatpush1.msra.mxu0 0.0
    %758 = vmatprep.subr.mxu0 0.0
    %759 = vmatpush1.msra.mxu0 0.0
    %760 = vmatprep.subr.mxu0 0.0
    %761 = vmatpush1.msra.mxu0 0.0
    %762 = vmatprep.subr.mxu0 0.0
    %763 = vmatpush1.msra.mxu0 0.0
    %764 = vmatprep.subr.mxu0 0.0
    %765 = vmatpush1.msra.mxu0 0.0
    %766 = vmatprep.mubr.f32.mxu0 0.0
    %767 = vmatmul.mubr.f32.gmra.mrb[0].mxu0 %v700
    %v768 = vpop.f32.mrb[0].mxu0
    %v769 = vadd.f32 0.0, %v768
    %v770 = vpop.f32.mrb[0].mxu0
    %771 = vdwg.mxu0
    %v772 = vadd.f32 %v683, %v769
    %s773 = scalar_lea.vmem %s5, 96
    %v774 = vld [vmem:[%s773] sm:$0xff]
    %v775 = vld [vmem:[%s773 + $0x8] sm:$0xff]
    %v776 = vld [vmem:[%s773 + $0x10] sm:$0xff]
    %v777 = vld [vmem:[%s773 + $0x18] sm:$0xff]
    %v778 = vlaneseq
    %v779 = vshrl.u32 %v778, 7
    %v780 = vsub.s32 3, %v779
    %v781 = vrot.slane %v512, %v780
    %v782 = vlaneseq
    %v783 = vshrl.u32 %v782, 7
    %v784 = vsub.s32 3, %v783
    %v785 = vrot.slane %v514, %v784
    %v786 = vsel %vm419, %v785, %v781
    %v787 = vsel %vm439, %v786, 0
    %789 = vmatprep.subr.mxu0 0.0
    %790 = vmatpush1.msra.mxu0 %v774
    %791 = vmatprep.subr.mxu0 0.0
    %792 = vmatpush1.msra.mxu0 %v775
    %793 = vmatprep.subr.mxu0 0.0
    %794 = vmatpush1.msra.mxu0 %v776
    %795 = vmatprep.subr.mxu0 0.0
    %796 = vmatpush1.msra.mxu0 %v777
    %797 = vmatprep.subr.mxu0 0.0
    %798 = vmatpush1.msra.mxu0 0.0
    %799 = vmatprep.subr.mxu0 0.0
    %800 = vmatpush1.msra.mxu0 0.0
    %801 = vmatprep.subr.mxu0 0.0
    %802 = vmatpush1.msra.mxu0 0.0
    %803 = vmatprep.subr.mxu0 0.0
    %804 = vmatpush1.msra.mxu0 0.0
    %805 = vmatprep.subr.mxu0 0.0
    %806 = vmatpush1.msra.mxu0 0.0
    %807 = vmatprep.subr.mxu0 0.0
    %808 = vmatpush1.msra.mxu0 0.0
    %809 = vmatprep.subr.mxu0 0.0
    %810 = vmatpush1.msra.mxu0 0.0
    %811 = vmatprep.subr.mxu0 0.0
    %812 = vmatpush1.msra.mxu0 0.0
    %813 = vmatprep.subr.mxu0 0.0
    %814 = vmatpush1.msra.mxu0 0.0
    %815 = vmatprep.subr.mxu0 0.0
    %816 = vmatpush1.msra.mxu0 0.0
    %817 = vmatprep.subr.mxu0 0.0
    %818 = vmatpush1.msra.mxu0 0.0
    %819 = vmatprep.subr.mxu0 0.0
    %820 = vmatpush1.msra.mxu0 0.0
    %821 = vmatprep.subr.mxu0 0.0
    %822 = vmatpush1.msra.mxu0 0.0
    %823 = vmatprep.subr.mxu0 0.0
    %824 = vmatpush1.msra.mxu0 0.0
    %825 = vmatprep.subr.mxu0 0.0
    %826 = vmatpush1.msra.mxu0 0.0
    %827 = vmatprep.subr.mxu0 0.0
    %828 = vmatpush1.msra.mxu0 0.0
    %829 = vmatprep.subr.mxu0 0.0
    %830 = vmatpush1.msra.mxu0 0.0
    %831 = vmatprep.subr.mxu0 0.0
    %832 = vmatpush1.msra.mxu0 0.0
    %833 = vmatprep.subr.mxu0 0.0
    %834 = vmatpush1.msra.mxu0 0.0
    %835 = vmatprep.subr.mxu0 0.0
    %836 = vmatpush1.msra.mxu0 0.0
    %837 = vmatprep.subr.mxu0 0.0
    %838 = vmatpush1.msra.mxu0 0.0
    %839 = vmatprep.subr.mxu0 0.0
    %840 = vmatpush1.msra.mxu0 0.0
    %841 = vmatprep.subr.mxu0 0.0
    %842 = vmatpush1.msra.mxu0 0.0
    %843 = vmatprep.subr.mxu0 0.0
    %844 = vmatpush1.msra.mxu0 0.0
    %845 = vmatprep.subr.mxu0 0.0
    %846 = vmatpush1.msra.mxu0 0.0
    %847 = vmatprep.subr.mxu0 0.0
    %848 = vmatpush1.msra.mxu0 0.0
    %849 = vmatprep.subr.mxu0 0.0
    %850 = vmatpush1.msra.mxu0 0.0
    %851 = vmatprep.subr.mxu0 0.0
    %852 = vmatpush1.msra.mxu0 0.0
    %853 = vmatprep.mubr.f32.mxu0 0.0
    %854 = vmatmul.mubr.f32.gmra.mrb[0].mxu0 %v787
    %v855 = vpop.f32.mrb[0].mxu0
    %v856 = vadd.f32 0.0, %v855
    %v857 = vpop.f32.mrb[0].mxu0
    %858 = vdwg.mxu0
    %v859 = vadd.f32 %v772, %v856
    %v860 = vld [vmem:[%s6] sm:$0x1]
    %v862 = vlaneseq
    %v863 = vshrl.u32 %v862, 7
    %v864 = vsub.s32 0, %v863
    %v865 = vrot.slane %v860, %v864
    %v867 = vadd.f32 %v859, %v865
    %v868 = vmax.f32 %v867, 0.0
    %v869 = vld [vmem:[#allocation5] sm:$0xff]
    %v870 = vld [vmem:[#allocation5 + $0x8] sm:$0xff]
    %v871 = vld [vmem:[#allocation5 + $0x10] sm:$0xff]
    %v872 = vld [vmem:[#allocation5 + $0x18] sm:$0xff]
    %v873 = vld [vmem:[#allocation5 + $0x20] sm:$0xff]
    %v874 = vld [vmem:[#allocation5 + $0x28] sm:$0xff]
    %v875 = vld [vmem:[#allocation5 + $0x30] sm:$0xff]
    %v876 = vld [vmem:[#allocation5 + $0x38] sm:$0xff]
    %v877 = vld [vmem:[%s8] sm:$0x1]
    %v879 = vlaneseq
    %v880 = vshrl.u32 %v879, 7
    %v881 = vsub.s32 0, %v880
    %v882 = vrot.slane %v877, %v881
    %vm884 = vcmask 523264
    %v886 = vsel %vm884, %v868, 0
    %888 = vmatprep.subr.mxu0 0.0
    %889 = vmatpush1.msra.mxu0 %v869
    %890 = vmatprep.subr.mxu0 0.0
    %891 = vmatpush1.msra.mxu0 %v870
    %892 = vmatprep.subr.mxu0 0.0
    %893 = vmatpush1.msra.mxu0 %v871
    %894 = vmatprep.subr.mxu0 0.0
    %895 = vmatpush1.msra.mxu0 %v872
    %896 = vmatprep.subr.mxu0 0.0
    %897 = vmatpush1.msra.mxu0 %v873
    %898 = vmatprep.subr.mxu0 0.0
    %899 = vmatpush1.msra.mxu0 %v874
    %900 = vmatprep.subr.mxu0 0.0
    %901 = vmatpush1.msra.mxu0 %v875
    %902 = vmatprep.subr.mxu0 0.0
    %903 = vmatpush1.msra.mxu0 %v876
    %904 = vmatprep.subr.mxu0 0.0
    %905 = vmatpush1.msra.mxu0 0.0
    %906 = vmatprep.subr.mxu0 0.0
    %907 = vmatpush1.msra.mxu0 0.0
    %908 = vmatprep.subr.mxu0 0.0
    %909 = vmatpush1.msra.mxu0 0.0
    %910 = vmatprep.subr.mxu0 0.0
    %911 = vmatpush1.msra.mxu0 0.0
    %912 = vmatprep.subr.mxu0 0.0
    %913 = vmatpush1.msra.mxu0 0.0
    %914 = vmatprep.subr.mxu0 0.0
    %915 = vmatpush1.msra.mxu0 0.0
    %916 = vmatprep.subr.mxu0 0.0
    %917 = vmatpush1.msra.mxu0 0.0
    %918 = vmatprep.subr.mxu0 0.0
    %919 = vmatpush1.msra.mxu0 0.0
    %920 = vmatprep.subr.mxu0 0.0
    %921 = vmatpush1.msra.mxu0 0.0
    %922 = vmatprep.subr.mxu0 0.0
    %923 = vmatpush1.msra.mxu0 0.0
    %924 = vmatprep.subr.mxu0 0.0
    %925 = vmatpush1.msra.mxu0 0.0
    %926 = vmatprep.subr.mxu0 0.0
    %927 = vmatpush1.msra.mxu0 0.0
    %928 = vmatprep.subr.mxu0 0.0
    %929 = vmatpush1.msra.mxu0 0.0
    %930 = vmatprep.subr.mxu0 0.0
    %931 = vmatpush1.msra.mxu0 0.0
    %932 = vmatprep.subr.mxu0 0.0
    %933 = vmatpush1.msra.mxu0 0.0
    %934 = vmatprep.subr.mxu0 0.0
    %935 = vmatpush1.msra.mxu0 0.0
    %936 = vmatprep.subr.mxu0 0.0
    %937 = vmatpush1.msra.mxu0 0.0
    %938 = vmatprep.subr.mxu0 0.0
    %939 = vmatpush1.msra.mxu0 0.0
    %940 = vmatprep.subr.mxu0 0.0
    %941 = vmatpush1.msra.mxu0 0.0
    %942 = vmatprep.subr.mxu0 0.0
    %943 = vmatpush1.msra.mxu0 0.0
    %944 = vmatprep.subr.mxu0 0.0
    %945 = vmatpush1.msra.mxu0 0.0
    %946 = vmatprep.subr.mxu0 0.0
    %947 = vmatpush1.msra.mxu0 0.0
    %948 = vmatprep.subr.mxu0 0.0
    %949 = vmatpush1.msra.mxu0 0.0
    %950 = vmatprep.subr.mxu0 0.0
    %951 = vmatpush1.msra.mxu0 0.0
    %952 = vmatprep.mubr.f32.mxu0 0.0
    %953 = vmatmul.mubr.f32.gmra.mrb[0].mxu0 %v886
    %v954 = vpop.f32.mrb[0].mxu0
    %v955 = vadd.f32 %v882, %v954
    %v956 = vpop.f32.mrb[0].mxu0
    %957 = vdwg.mxu0
    %v958 = vmax.f32 %v955, 0.0
    %v959 = vld [vmem:[%s9] sm:$0xff]
    %v960 = vld [vmem:[%s9 + $0x8] sm:$0xff]
    %v961 = vld [vmem:[%s9 + $0x10] sm:$0xff]
    %v962 = vld [vmem:[%s9 + $0x18] sm:$0xff]
    %v963 = vld [vmem:[%s9 + $0x20] sm:$0xff]
    %v964 = vld [vmem:[%s9 + $0x28] sm:$0xff]
    %v965 = vld [vmem:[%s9 + $0x30] sm:$0xff]
    %v966 = vld [vmem:[%s9 + $0x38] sm:$0xff]
    %v967 = vld [vmem:[#allocation2] sm:$0x1]
    %v969 = vlaneseq
    %v970 = vshrl.u32 %v969, 7
    %v971 = vsub.s32 0, %v970
    %v972 = vrot.slane %v967, %v971
    %v975 = vsel %vm884, %v958, 0
    %977 = vmatprep.subr.mxu0 0.0
    %978 = vmatpush1.msra.mxu0 %v959
    %979 = vmatprep.subr.mxu0 0.0
    %980 = vmatpush1.msra.mxu0 %v960
    %981 = vmatprep.subr.mxu0 0.0
    %982 = vmatpush1.msra.mxu0 %v961
    %983 = vmatprep.subr.mxu0 0.0
    %984 = vmatpush1.msra.mxu0 %v962
    %985 = vmatprep.subr.mxu0 0.0
    %986 = vmatpush1.msra.mxu0 %v963
    %987 = vmatprep.subr.mxu0 0.0
    %988 = vmatpush1.msra.mxu0 %v964
    %989 = vmatprep.subr.mxu0 0.0
    %990 = vmatpush1.msra.mxu0 %v965
    %991 = vmatprep.subr.mxu0 0.0
    %992 = vmatpush1.msra.mxu0 %v966
    %993 = vmatprep.subr.mxu0 0.0
    %994 = vmatpush1.msra.mxu0 0.0
    %995 = vmatprep.subr.mxu0 0.0
    %996 = vmatpush1.msra.mxu0 0.0
    %997 = vmatprep.subr.mxu0 0.0
    %998 = vmatpush1.msra.mxu0 0.0
    %999 = vmatprep.subr.mxu0 0.0
    %1000 = vmatpush1.msra.mxu0 0.0
    %1001 = vmatprep.subr.mxu0 0.0
    %1002 = vmatpush1.msra.mxu0 0.0
    %1003 = vmatprep.subr.mxu0 0.0
    %1004 = vmatpush1.msra.mxu0 0.0
    %1005 = vmatprep.subr.mxu0 0.0
    %1006 = vmatpush1.msra.mxu0 0.0
    %1007 = vmatprep.subr.mxu0 0.0
    %1008 = vmatpush1.msra.mxu0 0.0
    %1009 = vmatprep.subr.mxu0 0.0
    %1010 = vmatpush1.msra.mxu0 0.0
    %1011 = vmatprep.subr.mxu0 0.0
    %1012 = vmatpush1.msra.mxu0 0.0
    %1013 = vmatprep.subr.mxu0 0.0
    %1014 = vmatpush1.msra.mxu0 0.0
    %1015 = vmatprep.subr.mxu0 0.0
    %1016 = vmatpush1.msra.mxu0 0.0
    %1017 = vmatprep.subr.mxu0 0.0
    %1018 = vmatpush1.msra.mxu0 0.0
    %1019 = vmatprep.subr.mxu0 0.0
    %1020 = vmatpush1.msra.mxu0 0.0
    %1021 = vmatprep.subr.mxu0 0.0
    %1022 = vmatpush1.msra.mxu0 0.0
    %1023 = vmatprep.subr.mxu0 0.0
    %1024 = vmatpush1.msra.mxu0 0.0
    %1025 = vmatprep.subr.mxu0 0.0
    %1026 = vmatpush1.msra.mxu0 0.0
    %1027 = vmatprep.subr.mxu0 0.0
    %1028 = vmatpush1.msra.mxu0 0.0
    %1029 = vmatprep.subr.mxu0 0.0
    %1030 = vmatpush1.msra.mxu0 0.0
    %1031 = vmatprep.subr.mxu0 0.0
    %1032 = vmatpush1.msra.mxu0 0.0
    %1033 = vmatprep.subr.mxu0 0.0
    %1034 = vmatpush1.msra.mxu0 0.0
    %1035 = vmatprep.subr.mxu0 0.0
    %1036 = vmatpush1.msra.mxu0 0.0
    %1037 = vmatprep.subr.mxu0 0.0
    %1038 = vmatpush1.msra.mxu0 0.0
    %1039 = vmatprep.subr.mxu0 0.0
    %1040 = vmatpush1.msra.mxu0 0.0
    %1041 = vmatprep.mubr.f32.mxu0 0.0
    %1042 = vmatmul.mubr.f32.gmra.mrb[0].mxu0 %v975
    %v1043 = vpop.f32.mrb[0].mxu0
    %v1044 = vadd.f32 %v972, %v1043
    %v1045 = vpop.f32.mrb[0].mxu0
    %1046 = vdwg.mxu0
    %vm1047 = vcmask 1024
    %1048 = vst.msk [vmem:[%s11] sm:$0x3] %vm1047, %v1044
    // Predicated region
    $region54: #{tpu_custom_call.1} parent=1 // pred_check
      _
    $region55: #{tpu_custom_call.1} parent=1 // pred_check_branch
      %1050 = sbr.rel (0) target = $region57
    $region56: #{tpu_custom_call.1} parent=1 // pred_region
      _
    $region57: #{tpu_custom_call.1} parent=1 // pred_fallthru
      _
    // Predicated region
    $region58: #{tpu_custom_call.1} parent=1 // pred_check
      _
    $region59: #{tpu_custom_call.1} parent=1 // pred_check_branch
      %1052 = sbr.rel (0) target = $region61
    $region60: #{tpu_custom_call.1} parent=1 // pred_region
      _
    $region61: #{tpu_custom_call.1} parent=1 // pred_fallthru
      _
    %1053 = vsyncpa [#allocation4], 1
    %1054 = vsyncpa [#allocation6], 1

</llo_original>
